<compile_context>
chip_gen: v7x
topology: tpu7x:2x2x1
jax: 0.10.0
libtpu: 0.0.40
codegen_flags: <defaults>
</compile_context>

<pallas_src>
import numpy as np
import jax
import jax.numpy as jnp
from jax.experimental import pallas as pl
from jax.experimental.pallas import tpu as pltpu


def _bias_kernel(x_ref, b_ref, o_ref):
    # x_ref: (tm, th) input tile (input dtype), b_ref: (1, th) bias row
    # (compute dtype), o_ref: (tm, th) output tile (compute dtype).
    # Fused cast-to-compute-dtype + broadcast bias add in one VPU pass.
    o_ref[...] = x_ref[...].astype(o_ref.dtype) + b_ref[...]


def _round_up(x, m):
    return ((x + m - 1) // m) * m


def bias_forward(inputs, bias, *, dtype=jnp.float32):
    """inputs: [..., H], bias: [H]. Returns inputs.astype(dtype) + bias."""
    orig_shape = inputs.shape
    H = int(orig_shape[-1])
    assert bias.shape == (H,), "bias must have shape [inputs.shape[-1]]"

    N = 1
    for d in orig_shape[:-1]:
        N *= int(d)

    # Degenerate empty tensor: nothing to compute.
    if N == 0 or H == 0:
        return jnp.zeros(orig_shape, dtype=dtype)

    x2d = inputs.reshape(N, H)
    b2d = bias.astype(dtype).reshape(1, H)

    in_dsize = np.dtype(x2d.dtype).itemsize
    out_dsize = np.dtype(dtype).itemsize
    # Sublane granularity for the narrowest dtype involved:
    # 8 rows (4-byte), 16 (2-byte), 32 (1-byte).
    sublane = max(8, 32 // max(min(in_dsize, out_dsize), 1))

    # Generation-aware per-block byte target (in + out bytes of one block).
    try:
        vmem_cap = int(pltpu.get_tpu_info().vmem_capacity_bytes)
    except Exception:  # conservative fallback
        vmem_cap = 64 << 20
    if vmem_cap <= (64 << 20):      # v7x-class: 64 MiB VMEM per TC
        block_byte_target = 4 << 20
    else:                           # v5e / v6e: 128 MiB VMEM
        block_byte_target = 12 << 20

    # Optionally split H (128-lane multiples) if even a minimum-row full-H
    # block exceeds the byte target (very wide hidden dims).
    th = H
    tile_h = False
    if (H % 128 == 0) and (sublane * H * (in_dsize + out_dsize) > block_byte_target):
        lanes = block_byte_target // (sublane * (in_dsize + out_dsize))
        th = max(128, (lanes // 128) * 128)
        th = min(th, H)
        tile_h = True
    grid_h = pl.cdiv(H, th)

    # Rows per block from the byte target (counting input + output bytes).
    per_row_bytes = th * (in_dsize + out_dsize)
    rows = block_byte_target // per_row_bytes
    rows = max(sublane, (rows // sublane) * sublane)
    tm = min(rows, _round_up(N, sublane))

    # Keep >= 2 token blocks when possible so "parallel" can use both
    # TensorCores on v7x (unless the H axis already supplies parallelism).
    if grid_h == 1 and N > sublane:
        tm_two = _round_up(pl.cdiv(N, 2), sublane)
        tm = max(sublane, min(tm, tm_two))

    grid_n = pl.cdiv(N, tm)

    cost = pl.CostEstimate(
        flops=N * H,                                            # one add per element
        transcendentals=0,
        bytes_accessed=N * H * (in_dsize + out_dsize) + H * out_dsize,
    )

    # Double-buffered input + output tiles + bias row + slack.
    vmem_need = (2 * tm * th * in_dsize + 2 * tm * th * out_dsize
                 + 2 * th * out_dsize)
    vmem_bytes = int(vmem_need + (4 << 20))

    if tile_h:
        grid = (grid_n, grid_h)
        in_specs = [
            pl.BlockSpec((tm, th), lambda i, j: (i, j)),   # x tile
            pl.BlockSpec((1, th), lambda i, j: (0, j)),    # bias lane-tile
        ]
        out_specs = pl.BlockSpec((tm, th), lambda i, j: (i, j))
        dims = ("parallel", "parallel")
    else:
        grid = (grid_n,)
        in_specs = [
            pl.BlockSpec((tm, th), lambda i: (i, 0)),      # x tile (full H)
            pl.BlockSpec((1, th), lambda i: (0, 0)),       # bias row (resident)
        ]
        out_specs = pl.BlockSpec((tm, th), lambda i: (i, 0))
        dims = ("parallel",)

    out2d = pl.pallas_call(
        _bias_kernel,
        out_shape=jax.ShapeDtypeStruct((N, H), dtype),
        grid_spec=pltpu.PrefetchScalarGridSpec(
            num_scalar_prefetch=0,
            grid=grid,
            in_specs=in_specs,
            out_specs=out_specs,
        ),
        compiler_params=pltpu.CompilerParams(
            dimension_semantics=dims,
            vmem_limit_bytes=vmem_bytes,
        ),
        cost_estimate=cost,
    )(x2d, b2d)

    return out2d.reshape(orig_shape)


if __name__ == "__main__":
    # Small shapes consistent with the module: [batch, seq, hidden].
    B, S, H = 2, 8, 128

    key = jax.random.PRNGKey(0)
    kx, kb = jax.random.split(key)

    x = jax.random.normal(kx, (B, S, H), dtype=jnp.float32)
    # Module default bias_init is zeros_; use non-zero values so the add path
    # is actually exercised.
    bias = 0.1 * jax.random.normal(kb, (H,), dtype=jnp.float32)

    out = jax.block_until_ready(bias_forward(x, bias, dtype=jnp.float32))
    ref = x.astype(jnp.float32) + bias
    assert out.shape == x.shape and out.dtype == jnp.float32
    assert jnp.allclose(out, ref, atol=1e-6, rtol=1e-6), "mismatch vs reference (f32)"

    # Fused in-kernel cast path (bf16 input, f32 compute dtype), matching
    # `inputs = inputs.to(self.dtype)` in the PyTorch forward.
    x_bf16 = x.astype(jnp.bfloat16)
    out2 = jax.block_until_ready(bias_forward(x_bf16, bias, dtype=jnp.float32))
    ref2 = x_bf16.astype(jnp.float32) + bias
    assert out2.dtype == jnp.float32
    assert jnp.allclose(out2, ref2, atol=1e-6, rtol=1e-6), "mismatch vs reference (bf16 in)"

    # Ragged token count (N = 15 not a multiple of the 8-row tile): the grid
    # masks the partial last block, no host-side pad/slice needed.
    x_odd = jax.random.normal(kx, (3, 5, H), dtype=jnp.float32)
    out3 = jax.block_until_ready(bias_forward(x_odd, bias, dtype=jnp.float32))
    ref3 = x_odd.astype(jnp.float32) + bias
    assert out3.shape == x_odd.shape
    assert jnp.allclose(out3, ref3, atol=1e-6, rtol=1e-6), "mismatch vs reference (ragged N)"

    print("KERNEL_OK")
</pallas_src>

<mosaic_0001>
module attributes {stable_mosaic.version = 11 : i64} {
  func.func @_bias_kernel(%arg0: i32, %arg1: memref<8x128xf32, #tpu.memory_space<vmem>>, %arg2: memref<1x128xf32, #tpu.memory_space<vmem>>, %arg3: memref<8x128xf32, #tpu.memory_space<vmem>>) attributes {dimension_semantics = [#tpu.dimension_semantics<parallel>], iteration_bounds = array<i64: 2>, scalar_prefetch = 0 : i64, scratch_operands = 0 : i64, tpu.core_type = #tpu.core_type<tc>, window_params = [{transform_indices = @transform_0, window_bounds = array<i64: 8, 128>}, {pipeline_mode = #tpu.pipeline_mode<synchronous>, transform_indices = @transform_1, window_bounds = array<i64: 1, 128>}, {transform_indices = @transform_2, window_bounds = array<i64: 8, 128>}]} {
    %c0 = arith.constant 0 : index
    %c0_0 = arith.constant 0 : index
    %0 = vector.load %arg1[%c0, %c0_0] : memref<8x128xf32, #tpu.memory_space<vmem>>, vector<8x128xf32>
    %c0_1 = arith.constant 0 : index
    %c0_2 = arith.constant 0 : index
    %1 = vector.load %arg2[%c0_1, %c0_2] : memref<1x128xf32, #tpu.memory_space<vmem>>, vector<1x128xf32>
    %2 = vector.broadcast %1 : vector<1x128xf32> to vector<8x128xf32>
    %3 = arith.addf %0, %2 : vector<8x128xf32>
    %c0_3 = arith.constant 0 : index
    %c0_4 = arith.constant 0 : index
    %4 = vector.load %arg3[%c0_3, %c0_4] : memref<8x128xf32, #tpu.memory_space<vmem>>, vector<8x128xf32>
    tpu.vector_store %arg3[%c0_3, %c0_4], %3 {strides = array<i32>} : memref<8x128xf32, #tpu.memory_space<vmem>>, vector<8x128xf32>,
    return
  }
  func.func @transform_0(%arg0: i32) -> (i32, i32) {
    %c0_i32 = arith.constant 0 : i32
    %c0_i32_0 = arith.constant 0 : i32
    return %arg0, %c0_i32 : i32, i32
  }
  func.func @transform_1(%arg0: i32) -> (i32, i32) {
    %c0_i32 = arith.constant 0 : i32
    %c0_i32_0 = arith.constant 0 : i32
    %c0_i32_1 = arith.constant 0 : i32
    return %c0_i32, %c0_i32_0 : i32, i32
  }
  func.func @transform_2(%arg0: i32) -> (i32, i32) {
    %c0_i32 = arith.constant 0 : i32
    %c0_i32_0 = arith.constant 0 : i32
    return %arg0, %c0_i32 : i32, i32
  }
}

</mosaic_0001>

<llo_original>
// kernel: tpu_custom_call.1
$region0: #{tpu_custom_call.1}
  #allocation0 [shape = 'u32[]', space=smem, size = 0x4, offset = 0x4, fixed_abs, tag = 'smem constant byte address 0x4 - core index']
  #allocation1 [shape = 'u32[144,128]{1,0:T(1,128)}', space=vmem, size = 0x12000, scoped, tag = 'internal scratch']
  %s0 = inlined_call_operand.hbm [shape: f32[16,128], index: 0, kind: input, shape index: {}]
  %s1 = inlined_call_operand.vmem [shape: f32[1,128], index: 1, kind: input, shape index: {}]
  %s2 = inlined_call_operand.hbm [shape: f32[16,128], index: 2, kind: output, shape index: {}]
  %s3 = sld [smem:[#allocation0]]
  $region45: #{tpu_custom_call.1} parent=0
    _
  %s5 = ssub.s32 1, %s3
  %s6 = scalar_select 0, %s5, %s3
  $region1: #{tpu_custom_call.1} parent=0
    #allocation2 [shape = 'u8[8192]{0}', space=vmem, size = 0x2000, scoped, tag = 'input window, operand 0']
    #allocation3 [shape = 's32[2]{0}', space=sflag, size = 0x8, scoped, tag = 'scoped memory for tpu_custom_call.1']
    #allocation4 [shape = 's32[2]{0}', space=sflag, size = 0x8, scoped, tag = 'scoped memory for tpu_custom_call.1']
    #allocation5 [shape = 'u8[8192]{0}', space=vmem, size = 0x2000, scoped, tag = 'output window, operand 0']
    %7 = vsyncpa [#allocation3], 0
    %s8 = scalar_lea.sflag [#allocation3], 1
    %9 = vsyncpa %s8, 0
    %10 = vsyncpa [#allocation4], 0
    %s11 = scalar_lea.sflag [#allocation4], 1
    %12 = vsyncpa %s11, 0
    loop: start=0, step=1, limit=4
    $region2: #{tpu_custom_call.1} parent=1 // loop_pre_header
      _
    $region3: #{tpu_custom_call.1} parent=1 // loop_header
      %s14 = sphi 0, %s18
      %p15 = scmp.ge.s32.totalorder %s14, 4
      %s24 = sphi 0, %s26
      %s27 = sphi 0, %s24
      %s28 = sphi 0, %s27
      %s44 = sphi 0, %s28
      %s48 = sphi 0, %s48
      %s50 = sphi 0, %s48
      %s51 = sphi 0, %s50
      %s65 = sphi 0, %s51
      %s71 = sphi 0, %s73
      %s74 = sphi 0, %s71
      %s75 = sphi 0, %s74
      %s91 = sphi 0, %s75
    $region4: #{tpu_custom_call.1} parent=1 // loop_header_branch
      %17 = sbr.rel (%p15) target = $region8
    $region5: #{tpu_custom_call.1} parent=1 // loop_body
      %s19 = ssub.s32 %s14, 1
      %s20 = ssub.s32 %s14, 2
      %s21 = sadd.s32 %s14, 1
      %s22 = ssub.s32 %s14, %s21
      %p23 = scmp.eq.s32.totalorder %s22, 0
      %s25 = sadd.s32 %s24, 1
      %s26 = scalar_select %p23, %s24, %s25
      %p29 = pneg %p23
      %p30 = scmp.eq.s32.totalorder %s14, 1
      %p31 = por %p29, %p30
      %p32 = scmp.ne.s32.totalorder %s24, %s27
      %p33 = scmp.eq.s32.totalorder %s14, 0
      %p34 = por %p32, %p33
      %p35 = scmp.ne.s32.totalorder %s24, %s27
      %p36 = scmp.eq.s32.totalorder %s19, 1
      %p37 = por %p35, %p36
      %p38 = scmp.ne.s32.totalorder %s27, %s28
      %p39 = scmp.eq.s32.totalorder %s19, 0
      %p40 = por %p38, %p39
      %p41 = scmp.ne.s32.totalorder %s27, %s28
      %p42 = scmp.eq.s32.totalorder %s20, 1
      %p43 = por %p41, %p42
      %p45 = scmp.ne.s32.totalorder %s28, %s44
      %p46 = scmp.eq.s32.totalorder %s20, 0
      %p47 = por %p45, %p46
      %s49 = sadd.s32 %s48, 1
      %p52 = scmp.eq.s32.totalorder %s14, 1
      %p53 = scmp.ne.s32.totalorder %s48, %s50
      %p54 = scmp.eq.s32.totalorder %s14, 0
      %p55 = por %p53, %p54
      %p56 = scmp.ne.s32.totalorder %s48, %s50
      %p57 = scmp.eq.s32.totalorder %s19, 1
      %p58 = por %p56, %p57
      %p59 = scmp.ne.s32.totalorder %s50, %s51
      %p60 = scmp.eq.s32.totalorder %s19, 0
      %p61 = por %p59, %p60
      %p62 = scmp.ne.s32.totalorder %s50, %s51
      %p63 = scmp.eq.s32.totalorder %s20, 1
      %p64 = por %p62, %p63
      %p66 = scmp.ne.s32.totalorder %s51, %s65
      %p67 = scmp.eq.s32.totalorder %s20, 0
      %p68 = por %p66, %p67
      %s69 = ssub.s32 %s14, %s21
      %p70 = scmp.eq.s32.totalorder %s69, 0
      %s72 = sadd.s32 %s71, 1
      %s73 = scalar_select %p70, %s71, %s72
      %p76 = pneg %p70
      %p77 = scmp.eq.s32.totalorder %s14, 1
      %p78 = por %p76, %p77
      %p79 = scmp.ne.s32.totalorder %s71, %s74
      %p80 = scmp.eq.s32.totalorder %s14, 0
      %p81 = por %p79, %p80
      %p82 = scmp.ne.s32.totalorder %s71, %s74
      %p83 = scmp.eq.s32.totalorder %s19, 1
      %p84 = por %p82, %p83
      %p85 = scmp.ne.s32.totalorder %s74, %s75
      %p86 = scmp.eq.s32.totalorder %s19, 0
      %p87 = por %p85, %p86
      %p88 = scmp.ne.s32.totalorder %s74, %s75
      %p89 = scmp.eq.s32.totalorder %s20, 1
      %p90 = por %p88, %p89
      %p92 = scmp.ne.s32.totalorder %s75, %s91
      %p93 = scmp.eq.s32.totalorder %s20, 0
      %p94 = por %p92, %p93
      %p95 = scmp.le.s32.totalorder 1, %s14
      %p96 = scmp.lt.s32.totalorder %s14, 3
      %p97 = pnand %p95, %p96
      %p98 = pneg %p97
      // Predicated region
      $region9: #{tpu_custom_call.1} parent=5 // pred_check
        _
      $region10: #{tpu_custom_call.1} parent=5 // pred_check_branch
        %100 = sbr.rel (%p97) target = $region12
      $region11: #{tpu_custom_call.1} parent=5 // pred_region
        %s101 = ssub.s32 %s14, 1
        // Predicated region
        $region13: #{tpu_custom_call.1} parent=11 // pred_check
          %p102 = pneg %p61
        $region14: #{tpu_custom_call.1} parent=11 // pred_check_branch
          %104 = sbr.rel (%p102) target = $region16
        $region15: #{tpu_custom_call.1} parent=11 // pred_region
          _
        $region16: #{tpu_custom_call.1} parent=11 // pred_fallthru
          _
      $region12: #{tpu_custom_call.1} parent=5 // pred_fallthru
        _
      %p105 = scmp.lt.s32.totalorder %s14, 2
      // Predicated region
      $region17: #{tpu_custom_call.1} parent=5 // pred_check
        %p106 = pneg %p105
      $region18: #{tpu_custom_call.1} parent=5 // pred_check_branch
        %108 = sbr.rel (%p106) target = $region20
      $region19: #{tpu_custom_call.1} parent=5 // pred_region
        // Predicated region
        $region21: #{tpu_custom_call.1} parent=19 // pred_check
          %p109 = pneg %p34
        $region22: #{tpu_custom_call.1} parent=19 // pred_check_branch
          %111 = sbr.rel (%p109) target = $region24
        $region23: #{tpu_custom_call.1} parent=19 // pred_region
          %s112 = sand.u32 %s24, 1
          %s113 = scalar_lea.sflag [#allocation3], %s112
          %s114 = sand.u32 %s24, 1
          %s115 = smul.addr %s114, 8
          %s116 = scalar_lea.vmem [#allocation2], %s115
          %s118 = ssub.s32 128, 128
          %119 = vsyncadd %s113, %s118
          %s120 = smul.addr %s14, 128
          %s121 = scalar_lea.hbm %s0, %s120
          %s123 = sshll.u32 %s116, 4
          %s124 = int_to_ptr.vmem [resolvable:$true] %s123
          %126 = dma.hbm_to_vmem [thread:$0]  %s121, 128, %s124, %s113
        $region24: #{tpu_custom_call.1} parent=19 // pred_fallthru
          _
      $region20: #{tpu_custom_call.1} parent=5 // pred_fallthru
        _
      %p127 = scmp.le.s32.totalorder 1, %s14
      %p128 = scmp.lt.s32.totalorder %s14, 3
      %p129 = pnand %p127, %p128
      %p130 = pneg %p129
      // Predicated region
      $region25: #{tpu_custom_call.1} parent=5 // pred_check
        _
      $region26: #{tpu_custom_call.1} parent=5 // pred_check_branch
        %132 = sbr.rel (%p129) target = $region28
      $region27: #{tpu_custom_call.1} parent=5 // pred_region
        %s133 = ssub.s32 %s14, 1
        %s134 = sand.u32 %s27, 1
        %s135 = scalar_lea.sflag [#allocation3], %s134
        %s136 = sand.u32 %s27, 1
        %s137 = smul.addr %s136, 8
        %s138 = scalar_lea.vmem [#allocation2], %s137
        // Predicated region
        $region29: #{tpu_custom_call.1} parent=27 // pred_check
          %p139 = pneg %p40
        $region30: #{tpu_custom_call.1} parent=27 // pred_check_branch
          %141 = sbr.rel (%p139) target = $region32
        $region31: #{tpu_custom_call.1} parent=27 // pred_region
          %142 = dma.done %s135, 128
        $region32: #{tpu_custom_call.1} parent=27 // pred_fallthru
          _
        %s143 = sand.u32 %s27, 1
        %s144 = scalar_lea.sflag [#allocation3], %s143
        %s145 = sand.u32 %s27, 1
        %s146 = smul.addr %s145, 8
        %s147 = scalar_lea.vmem [#allocation2], %s146
        %p148 = pneg %p40
        %p149 = pneg %p37
        %p150 = pneg %p61
        %p151 = pneg %p58
        %p152 = pneg %p87
        %p153 = pneg %p84
        %s154 = sand.u32 %s74, 1
        %s155 = scalar_lea.sflag [#allocation4], %s154
        %s156 = sand.u32 %s74, 1
        %s157 = smul.addr %s156, 8
        %s158 = scalar_lea.vmem [#allocation5], %s157
        %v159 = vld [vmem:[%s138] sm:$0xff]
        %v160 = vld [vmem:[%s1] sm:$0x1]
        %v162 = vlaneseq
        %v163 = vshrl.u32 %v162, 7
        %v164 = vsub.s32 0, %v163
        %v165 = vrot.slane %v160, %v164
        %v167 = vadd.f32 %v159, %v165
        %168 = vst [vmem:[%s158] sm:$0xff] %v167
        %s169 = sand.u32 %s74, 1
        %s170 = scalar_lea.sflag [#allocation4], %s169
        %s171 = sand.u32 %s74, 1
        %s172 = smul.addr %s171, 8
        %s173 = scalar_lea.vmem [#allocation5], %s172
        // Predicated region
        $region33: #{tpu_custom_call.1} parent=27 // pred_check
          %p174 = pneg %p84
        $region34: #{tpu_custom_call.1} parent=27 // pred_check_branch
          %176 = sbr.rel (%p174) target = $region36
        $region35: #{tpu_custom_call.1} parent=27 // pred_region
          %s178 = ssub.s32 128, 128
          %179 = vsyncadd %s170, %s178
          %s180 = smul.addr %s19, 128
          %s181 = scalar_lea.hbm %s2, %s180
          %s183 = sshll.u32 %s173, 4
          %s184 = int_to_ptr.vmem [resolvable:$true] %s183
          %186 = dma.vmem_to_hbm [thread:$0]  %s184, 128, %s181, %s170
        $region36: #{tpu_custom_call.1} parent=27 // pred_fallthru
          _
      $region28: #{tpu_custom_call.1} parent=5 // pred_fallthru
        _
      %p187 = scmp.le.s32.totalorder 2, %s14
      // Predicated region
      $region37: #{tpu_custom_call.1} parent=5 // pred_check
        %p188 = pneg %p187
      $region38: #{tpu_custom_call.1} parent=5 // pred_check_branch
        %190 = sbr.rel (%p188) target = $region40
      $region39: #{tpu_custom_call.1} parent=5 // pred_region
        %s191 = ssub.s32 %s14, 2
        // Predicated region
        $region41: #{tpu_custom_call.1} parent=39 // pred_check
          %p192 = pneg %p90
        $region42: #{tpu_custom_call.1} parent=39 // pred_check_branch
          %194 = sbr.rel (%p192) target = $region44
        $region43: #{tpu_custom_call.1} parent=39 // pred_region
          %s195 = sand.u32 %s75, 1
          %s196 = scalar_lea.sflag [#allocation4], %s195
          %s197 = sand.u32 %s75, 1
          %s198 = smul.addr %s197, 8
          %s199 = scalar_lea.vmem [#allocation5], %s198
          %200 = dma.done %s196, 128
        $region44: #{tpu_custom_call.1} parent=39 // pred_fallthru
          _
      $region40: #{tpu_custom_call.1} parent=5 // pred_fallthru
        _
    $region6: #{tpu_custom_call.1} parent=1 // loop_footer
      %s18 = sadd.s32 1, %s14
    $region7: #{tpu_custom_call.1} parent=1 // loop_footer_branch
      %13 = sbr.rel target = $region3
    $region8: #{tpu_custom_call.1} parent=1 // loop_exit
      _
    %201 = vsyncpa [#allocation3], 1
    %s202 = scalar_lea.sflag [#allocation3], 1
    %203 = vsyncpa %s202, 1
    %204 = vsyncpa [#allocation4], 1
    %s205 = scalar_lea.sflag [#allocation4], 1
    %206 = vsyncpa %s205, 1

</llo_original>
